<compile_context>
chip_gen: v7x
topology: tpu7x:2x2x1
jax: 0.10.0
libtpu: 0.0.40
codegen_flags: <defaults>
</compile_context>

<pallas_src>
import jax
import jax.numpy as jnp
from jax.experimental import pallas as pl
from jax.experimental.pallas import tpu as pltpu

LANE = 128  # lane width: output slab padded to a multiple of this for unmasked stores


def rnn_kernel(xflat_ref, h0_ref, wih_ref, whh_ref, b_ref, wfc_ref, bout_ref, out_ref):
    """Single-invocation kernel.

    xflat_ref: (S*B, I) time-major flattened input
    h0_ref:    (B, H) initial hidden state
    wih_ref:   (I, H)      == torch W_ih^T
    whh_ref:   (H, H)      == torch W_hh^T
    b_ref:     (1, H)      pre-folded b_ih + b_hh
    wfc_ref:   (H, O_pad)  == torch W_fc^T, lane-padded
    bout_ref:  (1, O_pad)  pre-folded b_fc + ones, lane-padded
    out_ref:   (B, O_pad)  lane-dense output slab
    """
    h = h0_ref[...]                      # (B, H)
    B = h.shape[0]
    S = xflat_ref.shape[0] // B
    w_hh = whh_ref[...]                  # (H, H)

    # Input projection + recurrent bias, computed ONCE (off the serial h chain):
    # one (S*B, I) x (I, H) matmul instead of S tiny dots + S broadcast bias adds.
    xp = (
        jnp.dot(xflat_ref[...], wih_ref[...], preferred_element_type=jnp.float32)
        + b_ref[...]
    )                                    # (S*B, H)

    # Fully-unrolled recurrence: per step only dot + add + tanh on the h chain.
    for t in range(S):
        x_t = xp[t * B:(t + 1) * B, :]   # static row slice, (B, H)
        h = jnp.tanh(x_t + jnp.dot(h, w_hh, preferred_element_type=jnp.float32))

    # fc epilogue into the lane-dense (B, O_pad) slab; columns >= O are exact zeros.
    out_ref[...] = (
        jnp.dot(h, wfc_ref[...], preferred_element_type=jnp.float32)
        + bout_ref[...]
    ).astype(out_ref.dtype)


def prepare_params(params):
    """One-time (parameter-load-time) preprocessing: bias folds, lane padding."""
    H = params["w_hh"].shape[0]
    O = params["w_fc"].shape[1]
    O_pad = pl.cdiv(O, LANE) * LANE
    b_rnn = (params["b_ih"] + params["b_hh"]).reshape(1, H)
    w_fc_pad = jnp.zeros((H, O_pad), jnp.float32).at[:, :O].set(params["w_fc"])
    b_out_pad = jnp.zeros((1, O_pad), jnp.float32).at[:, :O].set(
        (params["b_fc"] + params["bias"]).reshape(1, O))
    prepped = {
        "w_ih": params["w_ih"],          # (I, H)  == torch W_ih^T
        "w_hh": params["w_hh"],          # (H, H)  == torch W_hh^T
        "b_rnn": b_rnn,                  # (1, H)
        "w_fc_pad": w_fc_pad,            # (H, O_pad)
        "b_out_pad": b_out_pad,          # (1, O_pad)
    }
    return prepped, O


def make_forward(output_size):
    """Returns a jitted forward(x, h0, prepped) -> (B, O)."""
    O = output_size

    @jax.jit
    def forward(x, h0, prepped):
        B, S, I = x.shape
        H = prepped["w_hh"].shape[0]
        O_pad = prepped["w_fc_pad"].shape[1]

        # (B, S, I) -> (S, B, I) -> (S*B, I): one cheap transpose+reshape, fused under jit.
        x_flat = jnp.transpose(x, (1, 0, 2)).reshape(S * B, I)
        h0_2d = h0[0]                    # (B, H)

        out_pad = pl.pallas_call(
            rnn_kernel,
            out_shape=jax.ShapeDtypeStruct((B, O_pad), jnp.float32),
            grid=(1,),  # single invocation: no per-step grid overhead
            in_specs=[
                pl.BlockSpec((S * B, I), lambda i: (0, 0)),     # x (time-major flat)
                pl.BlockSpec((B, H), lambda i: (0, 0)),         # h0
                pl.BlockSpec((I, H), lambda i: (0, 0)),         # W_ih^T
                pl.BlockSpec((H, H), lambda i: (0, 0)),         # W_hh^T
                pl.BlockSpec((1, H), lambda i: (0, 0)),         # b_ih + b_hh
                pl.BlockSpec((H, O_pad), lambda i: (0, 0)),     # W_fc^T (lane-padded)
                pl.BlockSpec((1, O_pad), lambda i: (0, 0)),     # b_fc + ones (lane-padded)
            ],
            out_specs=pl.BlockSpec((B, O_pad), lambda i: (0, 0)),
            compiler_params=pltpu.CompilerParams(
                dimension_semantics=("arbitrary",)),
        )(x_flat, h0_2d, prepped["w_ih"], prepped["w_hh"], prepped["b_rnn"],
          prepped["w_fc_pad"], prepped["b_out_pad"])

        return out_pad[:, :O]

    return forward


def reference_forward(x, h0, params):
    """Pure-JAX reference matching nn.RNN(batch_first) + fc + ones-bias."""
    B, S, I = x.shape
    h = h0[0]
    for t in range(S):
        h = jnp.tanh(x[:, t, :] @ params["w_ih"] + params["b_ih"]
                     + h @ params["w_hh"] + params["b_hh"])
    return h @ params["w_fc"] + params["b_fc"] + params["bias"]


def init_params(key, input_size, hidden_size, output_size):
    ks = jax.random.split(key, 6)
    scale = 1.0 / jnp.sqrt(hidden_size)
    # Stored pre-transposed relative to PyTorch: torch W_ih is (H, I) -> here (I, H), etc.
    return {
        "w_ih": jax.random.uniform(ks[0], (input_size, hidden_size),
                                   jnp.float32, -scale, scale),
        "w_hh": jax.random.uniform(ks[1], (hidden_size, hidden_size),
                                   jnp.float32, -scale, scale),
        "b_ih": jax.random.uniform(ks[2], (1, hidden_size),
                                   jnp.float32, -scale, scale),
        "b_hh": jax.random.uniform(ks[3], (1, hidden_size),
                                   jnp.float32, -scale, scale),
        "w_fc": jax.random.uniform(ks[4], (hidden_size, output_size),
                                   jnp.float32, -scale, scale),
        "b_fc": jax.random.uniform(ks[5], (1, output_size),
                                   jnp.float32, -scale, scale),
        "bias": jnp.ones((1, output_size), jnp.float32),  # nn.Parameter(torch.ones([O]))
    }


if __name__ == "__main__":
    batch, seq, input_size, hidden_size, output_size = 2, 8, 16, 32, 8

    key = jax.random.PRNGKey(0)
    k_x, k_h, k_p = jax.random.split(key, 3)

    x = jax.random.normal(k_x, (batch, seq, input_size), jnp.float32)
    h0 = jax.random.normal(k_h, (1, batch, hidden_size), jnp.float32)
    params = init_params(k_p, input_size, hidden_size, output_size)

    # One-time parameter preprocessing + jitted forward.
    prepped, out_size = prepare_params(params)
    prepped = jax.tree_util.tree_map(jax.block_until_ready, prepped)
    forward = make_forward(out_size)

    out = forward(x, h0, prepped)
    out = jax.block_until_ready(out)

    ref = reference_forward(x, h0, params)
    if not jnp.allclose(out, ref, atol=1e-5, rtol=1e-5):
        raise AssertionError("Pallas kernel output does not match reference")

    print("KERNEL_OK")
</pallas_src>

<mosaic_0001>
module attributes {stable_mosaic.version = 11 : i64} {
  func.func @rnn_kernel(%arg0: i32, %arg1: memref<16x16xf32, #tpu.memory_space<vmem>>, %arg2: memref<2x32xf32, #tpu.memory_space<vmem>>, %arg3: memref<16x32xf32, #tpu.memory_space<vmem>>, %arg4: memref<32x32xf32, #tpu.memory_space<vmem>>, %arg5: memref<1x32xf32, #tpu.memory_space<vmem>>, %arg6: memref<32x128xf32, #tpu.memory_space<vmem>>, %arg7: memref<1x128xf32, #tpu.memory_space<vmem>>, %arg8: memref<2x128xf32, #tpu.memory_space<vmem>>) attributes {dimension_semantics = [#tpu.dimension_semantics<arbitrary>], iteration_bounds = array<i64: 1>, scalar_prefetch = 0 : i64, scratch_operands = 0 : i64, tpu.core_type = #tpu.core_type<tc>, window_params = [{pipeline_mode = #tpu.pipeline_mode<synchronous>, transform_indices = @transform_0, window_bounds = array<i64: 16, 16>}, {pipeline_mode = #tpu.pipeline_mode<synchronous>, transform_indices = @transform_1, window_bounds = array<i64: 2, 32>}, {pipeline_mode = #tpu.pipeline_mode<synchronous>, transform_indices = @transform_2, window_bounds = array<i64: 16, 32>}, {pipeline_mode = #tpu.pipeline_mode<synchronous>, transform_indices = @transform_3, window_bounds = array<i64: 32, 32>}, {pipeline_mode = #tpu.pipeline_mode<synchronous>, transform_indices = @transform_4, window_bounds = array<i64: 1, 32>}, {pipeline_mode = #tpu.pipeline_mode<synchronous>, transform_indices = @transform_5, window_bounds = array<i64: 32, 128>}, {pipeline_mode = #tpu.pipeline_mode<synchronous>, transform_indices = @transform_6, window_bounds = array<i64: 1, 128>}, {pipeline_mode = #tpu.pipeline_mode<synchronous>, transform_indices = @transform_7, window_bounds = array<i64: 2, 128>}]} {
    %c0 = arith.constant 0 : index
    %c0_0 = arith.constant 0 : index
    %0 = vector.load %arg2[%c0, %c0_0] : memref<2x32xf32, #tpu.memory_space<vmem>>, vector<2x32xf32>
    %c0_1 = arith.constant 0 : index
    %c0_2 = arith.constant 0 : index
    %1 = vector.load %arg4[%c0_1, %c0_2] : memref<32x32xf32, #tpu.memory_space<vmem>>, vector<32x32xf32>
    %c0_3 = arith.constant 0 : index
    %c0_4 = arith.constant 0 : index
    %2 = vector.load %arg1[%c0_3, %c0_4] : memref<16x16xf32, #tpu.memory_space<vmem>>, vector<16x16xf32>
    %c0_5 = arith.constant 0 : index
    %c0_6 = arith.constant 0 : index
    %3 = vector.load %arg3[%c0_5, %c0_6] : memref<16x32xf32, #tpu.memory_space<vmem>>, vector<16x32xf32>
    %cst = arith.constant dense<0.000000e+00> : vector<16x32xf32>
    %4 = tpu.matmul %2, %3, %cst {dimension_numbers = #tpu.dot_dimension_numbers<[1], [0], [0], [1], [0, 0, 1, 1], [], []>} : vector<16x16xf32>, vector<16x32xf32>, vector<16x32xf32> -> vector<16x32xf32>
    %c0_7 = arith.constant 0 : index
    %c0_8 = arith.constant 0 : index
    %5 = vector.load %arg5[%c0_7, %c0_8] : memref<1x32xf32, #tpu.memory_space<vmem>>, vector<1x32xf32>
    %6 = vector.broadcast %5 : vector<1x32xf32> to vector<16x32xf32>
    %7 = arith.addf %4, %6 : vector<16x32xf32>
    %8 = vector.extract_strided_slice %7 {offsets = [0, 0], sizes = [2, 32], strides = [1, 1]} : vector<16x32xf32> to vector<2x32xf32>
    %cst_9 = arith.constant dense<0.000000e+00> : vector<2x32xf32>
    %9 = tpu.matmul %0, %1, %cst_9 {dimension_numbers = #tpu.dot_dimension_numbers<[1], [0], [0], [1], [0, 0, 1, 1], [], []>} : vector<2x32xf32>, vector<32x32xf32>, vector<2x32xf32> -> vector<2x32xf32>
    %10 = arith.addf %8, %9 : vector<2x32xf32>
    %11 = math.tanh %10 : vector<2x32xf32>
    %12 = vector.extract_strided_slice %7 {offsets = [2, 0], sizes = [2, 32], strides = [1, 1]} : vector<16x32xf32> to vector<2x32xf32>
    %cst_10 = arith.constant dense<0.000000e+00> : vector<2x32xf32>
    %13 = tpu.matmul %11, %1, %cst_10 {dimension_numbers = #tpu.dot_dimension_numbers<[1], [0], [0], [1], [0, 0, 1, 1], [], []>} : vector<2x32xf32>, vector<32x32xf32>, vector<2x32xf32> -> vector<2x32xf32>
    %14 = arith.addf %12, %13 : vector<2x32xf32>
    %15 = math.tanh %14 : vector<2x32xf32>
    %16 = vector.extract_strided_slice %7 {offsets = [4, 0], sizes = [2, 32], strides = [1, 1]} : vector<16x32xf32> to vector<2x32xf32>
    %cst_11 = arith.constant dense<0.000000e+00> : vector<2x32xf32>
    %17 = tpu.matmul %15, %1, %cst_11 {dimension_numbers = #tpu.dot_dimension_numbers<[1], [0], [0], [1], [0, 0, 1, 1], [], []>} : vector<2x32xf32>, vector<32x32xf32>, vector<2x32xf32> -> vector<2x32xf32>
    %18 = arith.addf %16, %17 : vector<2x32xf32>
    %19 = math.tanh %18 : vector<2x32xf32>
    %20 = vector.extract_strided_slice %7 {offsets = [6, 0], sizes = [2, 32], strides = [1, 1]} : vector<16x32xf32> to vector<2x32xf32>
    %cst_12 = arith.constant dense<0.000000e+00> : vector<2x32xf32>
    %21 = tpu.matmul %19, %1, %cst_12 {dimension_numbers = #tpu.dot_dimension_numbers<[1], [0], [0], [1], [0, 0, 1, 1], [], []>} : vector<2x32xf32>, vector<32x32xf32>, vector<2x32xf32> -> vector<2x32xf32>
    %22 = arith.addf %20, %21 : vector<2x32xf32>
    %23 = math.tanh %22 : vector<2x32xf32>
    %24 = vector.extract_strided_slice %7 {offsets = [8, 0], sizes = [2, 32], strides = [1, 1]} : vector<16x32xf32> to vector<2x32xf32>
    %cst_13 = arith.constant dense<0.000000e+00> : vector<2x32xf32>
    %25 = tpu.matmul %23, %1, %cst_13 {dimension_numbers = #tpu.dot_dimension_numbers<[1], [0], [0], [1], [0, 0, 1, 1], [], []>} : vector<2x32xf32>, vector<32x32xf32>, vector<2x32xf32> -> vector<2x32xf32>
    %26 = arith.addf %24, %25 : vector<2x32xf32>
    %27 = math.tanh %26 : vector<2x32xf32>
    %28 = vector.extract_strided_slice %7 {offsets = [10, 0], sizes = [2, 32], strides = [1, 1]} : vector<16x32xf32> to vector<2x32xf32>
    %cst_14 = arith.constant dense<0.000000e+00> : vector<2x32xf32>
    %29 = tpu.matmul %27, %1, %cst_14 {dimension_numbers = #tpu.dot_dimension_numbers<[1], [0], [0], [1], [0, 0, 1, 1], [], []>} : vector<2x32xf32>, vector<32x32xf32>, vector<2x32xf32> -> vector<2x32xf32>
    %30 = arith.addf %28, %29 : vector<2x32xf32>
    %31 = math.tanh %30 : vector<2x32xf32>
    %32 = vector.extract_strided_slice %7 {offsets = [12, 0], sizes = [2, 32], strides = [1, 1]} : vector<16x32xf32> to vector<2x32xf32>
    %cst_15 = arith.constant dense<0.000000e+00> : vector<2x32xf32>
    %33 = tpu.matmul %31, %1, %cst_15 {dimension_numbers = #tpu.dot_dimension_numbers<[1], [0], [0], [1], [0, 0, 1, 1], [], []>} : vector<2x32xf32>, vector<32x32xf32>, vector<2x32xf32> -> vector<2x32xf32>
    %34 = arith.addf %32, %33 : vector<2x32xf32>
    %35 = math.tanh %34 : vector<2x32xf32>
    %36 = vector.extract_strided_slice %7 {offsets = [14, 0], sizes = [2, 32], strides = [1, 1]} : vector<16x32xf32> to vector<2x32xf32>
    %cst_16 = arith.constant dense<0.000000e+00> : vector<2x32xf32>
    %37 = tpu.matmul %35, %1, %cst_16 {dimension_numbers = #tpu.dot_dimension_numbers<[1], [0], [0], [1], [0, 0, 1, 1], [], []>} : vector<2x32xf32>, vector<32x32xf32>, vector<2x32xf32> -> vector<2x32xf32>
    %38 = arith.addf %36, %37 : vector<2x32xf32>
    %39 = math.tanh %38 : vector<2x32xf32>
    %c0_17 = arith.constant 0 : index
    %c0_18 = arith.constant 0 : index
    %40 = vector.load %arg6[%c0_17, %c0_18] : memref<32x128xf32, #tpu.memory_space<vmem>>, vector<32x128xf32>
    %cst_19 = arith.constant dense<0.000000e+00> : vector<2x128xf32>
    %41 = tpu.matmul %39, %40, %cst_19 {dimension_numbers = #tpu.dot_dimension_numbers<[1], [0], [0], [1], [0, 0, 1, 1], [], []>} : vector<2x32xf32>, vector<32x128xf32>, vector<2x128xf32> -> vector<2x128xf32>
    %c0_20 = arith.constant 0 : index
    %c0_21 = arith.constant 0 : index
    %42 = vector.load %arg7[%c0_20, %c0_21] : memref<1x128xf32, #tpu.memory_space<vmem>>, vector<1x128xf32>
    %43 = vector.broadcast %42 : vector<1x128xf32> to vector<2x128xf32>
    %44 = arith.addf %41, %43 : vector<2x128xf32>
    %c0_22 = arith.constant 0 : index
    %c0_23 = arith.constant 0 : index
    %45 = vector.load %arg8[%c0_22, %c0_23] : memref<2x128xf32, #tpu.memory_space<vmem>>, vector<2x128xf32>
    tpu.vector_store %arg8[%c0_22, %c0_23], %44 {strides = array<i32>} : memref<2x128xf32, #tpu.memory_space<vmem>>, vector<2x128xf32>,
    return
  }
  func.func @transform_0(%arg0: i32) -> (i32, i32) {
    %c0_i32 = arith.constant 0 : i32
    %c0_i32_0 = arith.constant 0 : i32
    %c0_i32_1 = arith.constant 0 : i32
    return %c0_i32, %c0_i32_0 : i32, i32
  }
  func.func @transform_1(%arg0: i32) -> (i32, i32) {
    %c0_i32 = arith.constant 0 : i32
    %c0_i32_0 = arith.constant 0 : i32
    %c0_i32_1 = arith.constant 0 : i32
    return %c0_i32, %c0_i32_0 : i32, i32
  }
  func.func @transform_2(%arg0: i32) -> (i32, i32) {
    %c0_i32 = arith.constant 0 : i32
    %c0_i32_0 = arith.constant 0 : i32
    %c0_i32_1 = arith.constant 0 : i32
    return %c0_i32, %c0_i32_0 : i32, i32
  }
  func.func @transform_3(%arg0: i32) -> (i32, i32) {
    %c0_i32 = arith.constant 0 : i32
    %c0_i32_0 = arith.constant 0 : i32
    %c0_i32_1 = arith.constant 0 : i32
    return %c0_i32, %c0_i32_0 : i32, i32
  }
  func.func @transform_4(%arg0: i32) -> (i32, i32) {
    %c0_i32 = arith.constant 0 : i32
    %c0_i32_0 = arith.constant 0 : i32
    %c0_i32_1 = arith.constant 0 : i32
    return %c0_i32, %c0_i32_0 : i32, i32
  }
  func.func @transform_5(%arg0: i32) -> (i32, i32) {
    %c0_i32 = arith.constant 0 : i32
    %c0_i32_0 = arith.constant 0 : i32
    %c0_i32_1 = arith.constant 0 : i32
    return %c0_i32, %c0_i32_0 : i32, i32
  }
  func.func @transform_6(%arg0: i32) -> (i32, i32) {
    %c0_i32 = arith.constant 0 : i32
    %c0_i32_0 = arith.constant 0 : i32
    %c0_i32_1 = arith.constant 0 : i32
    return %c0_i32, %c0_i32_0 : i32, i32
  }
  func.func @transform_7(%arg0: i32) -> (i32, i32) {
    %c0_i32 = arith.constant 0 : i32
    %c0_i32_0 = arith.constant 0 : i32
    %c0_i32_1 = arith.constant 0 : i32
    return %c0_i32, %c0_i32_0 : i32, i32
  }
}

</mosaic_0001>

<llo_original>
// kernel: forward.1
$region0: #{forward.1}
  #allocation0 [shape = 'u32[]', space=smem, size = 0x4, offset = 0x4, fixed_abs, tag = 'smem constant byte address 0x4 - core index']
  #allocation1 [shape = 'u32[144,128]{1,0:T(1,128)}', space=vmem, size = 0x12000, scoped, tag = 'internal scratch']
  %s0 = inlined_call_operand.vmem [shape: f32[16,16], index: 0, kind: input, shape index: {}]
  %s1 = inlined_call_operand.vmem [shape: f32[2,32], index: 1, kind: input, shape index: {}]
  %s2 = inlined_call_operand.vmem [shape: f32[16,32], index: 2, kind: input, shape index: {}]
  %s3 = inlined_call_operand.vmem [shape: f32[32,32], index: 3, kind: input, shape index: {}]
  %s4 = inlined_call_operand.vmem [shape: f32[1,32], index: 4, kind: input, shape index: {}]
  %s5 = inlined_call_operand.hbm [shape: f32[32,128], index: 5, kind: input, shape index: {}]
  %s6 = inlined_call_operand.vmem [shape: f32[1,128], index: 6, kind: input, shape index: {}]
  %s7 = inlined_call_operand.hbm [shape: f32[2,128], index: 7, kind: output, shape index: {}]
  %s8 = sld [smem:[#allocation0]]
  $region42: #{forward.1} parent=0
    _
  %s10 = ssub.s32 1, %s8
  %s11 = scalar_select 0, %s10, %s8
  $region1: #{forward.1} parent=0
    #allocation2 [shape = 'u8[16384]{0}', space=vmem, size = 0x4000, scoped, tag = 'input window, operand 5, single buffered']
    #allocation3 [shape = 's32[1]{0}', space=sflag, size = 0x4, scoped, tag = 'scoped memory for forward.1']
    #allocation4 [shape = 's32[1]{0}', space=sflag, size = 0x4, scoped, tag = 'scoped memory for forward.1']
    #allocation5 [shape = 'u8[1024]{0}', space=vmem, size = 0x400, scoped, tag = 'output window, operand 0, single buffered']
    %12 = vsyncpa [#allocation3], 0
    %13 = vsyncpa [#allocation4], 0
    // Predicated region
    $region2: #{forward.1} parent=1 // pred_check
      _
    $region3: #{forward.1} parent=1 // pred_check_branch
      %15 = sbr.rel (0) target = $region5
    $region4: #{forward.1} parent=1 // pred_region
      _
    $region5: #{forward.1} parent=1 // pred_fallthru
      _
    // Predicated region
    $region6: #{forward.1} parent=1 // pred_check
      _
    $region7: #{forward.1} parent=1 // pred_check_branch
      %17 = sbr.rel (0) target = $region9
    $region8: #{forward.1} parent=1 // pred_region
      _
    $region9: #{forward.1} parent=1 // pred_fallthru
      _
    // Predicated region
    $region10: #{forward.1} parent=1 // pred_check
      _
    $region11: #{forward.1} parent=1 // pred_check_branch
      %19 = sbr.rel (0) target = $region13
    $region12: #{forward.1} parent=1 // pred_region
      _
    $region13: #{forward.1} parent=1 // pred_fallthru
      _
    // Predicated region
    $region14: #{forward.1} parent=1 // pred_check
      _
    $region15: #{forward.1} parent=1 // pred_check_branch
      %21 = sbr.rel (0) target = $region17
    $region16: #{forward.1} parent=1 // pred_region
      _
    $region17: #{forward.1} parent=1 // pred_fallthru
      _
    // Predicated region
    $region18: #{forward.1} parent=1 // pred_check
      _
    $region19: #{forward.1} parent=1 // pred_check_branch
      %23 = sbr.rel (0) target = $region21
    $region20: #{forward.1} parent=1 // pred_region
      _
    $region21: #{forward.1} parent=1 // pred_fallthru
      _
    // Predicated region
    $region22: #{forward.1} parent=1 // pred_check
      _
    $region23: #{forward.1} parent=1 // pred_check_branch
      %25 = sbr.rel (0) target = $region25
    $region24: #{forward.1} parent=1 // pred_region
      %s27 = ssub.s32 512, 512
      %28 = vsyncadd [#allocation3], %s27
      %s29 = sshll.u32 [#allocation2], 4
      %s30 = int_to_ptr.vmem [resolvable:$true] %s29
      %35 = dma.hbm_to_vmem [thread:$0]  %s5, 512, %s30, [#allocation3], 128, 128, 8
    $region25: #{forward.1} parent=1 // pred_fallthru
      _
    // Predicated region
    $region26: #{forward.1} parent=1 // pred_check
      _
    $region27: #{forward.1} parent=1 // pred_check_branch
      %37 = sbr.rel (0) target = $region29
    $region28: #{forward.1} parent=1 // pred_region
      _
    $region29: #{forward.1} parent=1 // pred_fallthru
      _
    // Predicated region
    $region30: #{forward.1} parent=1 // pred_check
      _
    $region31: #{forward.1} parent=1 // pred_check_branch
      %39 = sbr.rel (0) target = $region33
    $region32: #{forward.1} parent=1 // pred_region
      %40 = dma.done [#allocation3], 512
    $region33: #{forward.1} parent=1 // pred_fallthru
      _
    %v41 = vld [vmem:[%s1] sm:$0x3]
    %v42 = vld [vmem:[%s3] sm:$0xff]
    %v43 = vld [vmem:[%s3 + $0x8] sm:$0xff]
    %v44 = vld [vmem:[%s3 + $0x10] sm:$0xff]
    %v45 = vld [vmem:[%s3 + $0x18] sm:$0xff]
    %v46 = vld [vmem:[%s0] sm:$0xff]
    %v47 = vld [vmem:[%s0 + $0x8] sm:$0xff]
    %v48 = vld [vmem:[%s2] sm:$0xff]
    %v49 = vld [vmem:[%s2 + $0x8] sm:$0xff]
    %v50 = vld [vmem:[%s4] sm:$0x1]
    %v52 = vlaneseq
    %v53 = vshrl.u32 %v52, 7
    %v54 = vsub.s32 0, %v53
    %v55 = vrot.slane %v50, %v54
    %vm57 = vcmask 130048
    %v59 = vsel %vm57, %v46, 0
    %v62 = vsel %vm57, %v47, 0
    %64 = vmatprep.subr.mxu0 0.0
    %65 = vmatpush1.msra.mxu0 %v48
    %66 = vmatprep.subr.mxu0 0.0
    %67 = vmatpush1.msra.mxu0 %v49
    %68 = vmatprep.subr.mxu0 0.0
    %69 = vmatpush1.msra.mxu0 0.0
    %70 = vmatprep.subr.mxu0 0.0
    %71 = vmatpush1.msra.mxu0 0.0
    %72 = vmatprep.subr.mxu0 0.0
    %73 = vmatpush1.msra.mxu0 0.0
    %74 = vmatprep.subr.mxu0 0.0
    %75 = vmatpush1.msra.mxu0 0.0
    %76 = vmatprep.subr.mxu0 0.0
    %77 = vmatpush1.msra.mxu0 0.0
    %78 = vmatprep.subr.mxu0 0.0
    %79 = vmatpush1.msra.mxu0 0.0
    %80 = vmatprep.subr.mxu0 0.0
    %81 = vmatpush1.msra.mxu0 0.0
    %82 = vmatprep.subr.mxu0 0.0
    %83 = vmatpush1.msra.mxu0 0.0
    %84 = vmatprep.subr.mxu0 0.0
    %85 = vmatpush1.msra.mxu0 0.0
    %86 = vmatprep.subr.mxu0 0.0
    %87 = vmatpush1.msra.mxu0 0.0
    %88 = vmatprep.subr.mxu0 0.0
    %89 = vmatpush1.msra.mxu0 0.0
    %90 = vmatprep.subr.mxu0 0.0
    %91 = vmatpush1.msra.mxu0 0.0
    %92 = vmatprep.subr.mxu0 0.0
    %93 = vmatpush1.msra.mxu0 0.0
    %94 = vmatprep.subr.mxu0 0.0
    %95 = vmatpush1.msra.mxu0 0.0
    %96 = vmatprep.subr.mxu0 0.0
    %97 = vmatpush1.msra.mxu0 0.0
    %98 = vmatprep.subr.mxu0 0.0
    %99 = vmatpush1.msra.mxu0 0.0
    %100 = vmatprep.subr.mxu0 0.0
    %101 = vmatpush1.msra.mxu0 0.0
    %102 = vmatprep.subr.mxu0 0.0
    %103 = vmatpush1.msra.mxu0 0.0
    %104 = vmatprep.subr.mxu0 0.0
    %105 = vmatpush1.msra.mxu0 0.0
    %106 = vmatprep.subr.mxu0 0.0
    %107 = vmatpush1.msra.mxu0 0.0
    %108 = vmatprep.subr.mxu0 0.0
    %109 = vmatpush1.msra.mxu0 0.0
    %110 = vmatprep.subr.mxu0 0.0
    %111 = vmatpush1.msra.mxu0 0.0
    %112 = vmatprep.subr.mxu0 0.0
    %113 = vmatpush1.msra.mxu0 0.0
    %114 = vmatprep.subr.mxu0 0.0
    %115 = vmatpush1.msra.mxu0 0.0
    %116 = vmatprep.subr.mxu0 0.0
    %117 = vmatpush1.msra.mxu0 0.0
    %118 = vmatprep.subr.mxu0 0.0
    %119 = vmatpush1.msra.mxu0 0.0
    %120 = vmatprep.subr.mxu0 0.0
    %121 = vmatpush1.msra.mxu0 0.0
    %122 = vmatprep.subr.mxu0 0.0
    %123 = vmatpush1.msra.mxu0 0.0
    %124 = vmatprep.subr.mxu0 0.0
    %125 = vmatpush1.msra.mxu0 0.0
    %126 = vmatprep.subr.mxu0 0.0
    %127 = vmatpush1.msra.mxu0 0.0
    %128 = vmatprep.mubr.f32.mxu0 0.0
    %129 = vmatmul.mubr.f32.gmra.mrb[0].mxu0 %v59
    %v130 = vpop.f32.mrb[0].mxu0
    %v131 = vadd.f32 %v55, %v130
    %v132 = vpop.f32.mrb[0].mxu0
    %133 = vmatprep.mubr.f32.mxu0 0.0
    %134 = vmatmul.mubr.f32.gmra.mrb[0].mxu0 %v62
    %v135 = vpop.f32.mrb[0].mxu0
    %v136 = vadd.f32 %v55, %v135
    %v137 = vpop.f32.mrb[0].mxu0
    %138 = vdwg.mxu0
    %vm139 = vcmask 261120
    %v141 = vsel %vm139, %v41, 0
    %143 = vmatprep.subr.mxu0 0.0
    %144 = vmatpush1.msra.mxu0 %v42
    %145 = vmatprep.subr.mxu0 0.0
    %146 = vmatpush1.msra.mxu0 %v43
    %147 = vmatprep.subr.mxu0 0.0
    %148 = vmatpush1.msra.mxu0 %v44
    %149 = vmatprep.subr.mxu0 0.0
    %150 = vmatpush1.msra.mxu0 %v45
    %151 = vmatprep.subr.mxu0 0.0
    %152 = vmatpush1.msra.mxu0 0.0
    %153 = vmatprep.subr.mxu0 0.0
    %154 = vmatpush1.msra.mxu0 0.0
    %155 = vmatprep.subr.mxu0 0.0
    %156 = vmatpush1.msra.mxu0 0.0
    %157 = vmatprep.subr.mxu0 0.0
    %158 = vmatpush1.msra.mxu0 0.0
    %159 = vmatprep.subr.mxu0 0.0
    %160 = vmatpush1.msra.mxu0 0.0
    %161 = vmatprep.subr.mxu0 0.0
    %162 = vmatpush1.msra.mxu0 0.0
    %163 = vmatprep.subr.mxu0 0.0
    %164 = vmatpush1.msra.mxu0 0.0
    %165 = vmatprep.subr.mxu0 0.0
    %166 = vmatpush1.msra.mxu0 0.0
    %167 = vmatprep.subr.mxu0 0.0
    %168 = vmatpush1.msra.mxu0 0.0
    %169 = vmatprep.subr.mxu0 0.0
    %170 = vmatpush1.msra.mxu0 0.0
    %171 = vmatprep.subr.mxu0 0.0
    %172 = vmatpush1.msra.mxu0 0.0
    %173 = vmatprep.subr.mxu0 0.0
    %174 = vmatpush1.msra.mxu0 0.0
    %175 = vmatprep.subr.mxu0 0.0
    %176 = vmatpush1.msra.mxu0 0.0
    %177 = vmatprep.subr.mxu0 0.0
    %178 = vmatpush1.msra.mxu0 0.0
    %179 = vmatprep.subr.mxu0 0.0
    %180 = vmatpush1.msra.mxu0 0.0
    %181 = vmatprep.subr.mxu0 0.0
    %182 = vmatpush1.msra.mxu0 0.0
    %183 = vmatprep.subr.mxu0 0.0
    %184 = vmatpush1.msra.mxu0 0.0
    %185 = vmatprep.subr.mxu0 0.0
    %186 = vmatpush1.msra.mxu0 0.0
    %187 = vmatprep.subr.mxu0 0.0
    %188 = vmatpush1.msra.mxu0 0.0
    %189 = vmatprep.subr.mxu0 0.0
    %190 = vmatpush1.msra.mxu0 0.0
    %191 = vmatprep.subr.mxu0 0.0
    %192 = vmatpush1.msra.mxu0 0.0
    %193 = vmatprep.subr.mxu0 0.0
    %194 = vmatpush1.msra.mxu0 0.0
    %195 = vmatprep.subr.mxu0 0.0
    %196 = vmatpush1.msra.mxu0 0.0
    %197 = vmatprep.subr.mxu0 0.0
    %198 = vmatpush1.msra.mxu0 0.0
    %199 = vmatprep.subr.mxu0 0.0
    %200 = vmatpush1.msra.mxu0 0.0
    %201 = vmatprep.subr.mxu0 0.0
    %202 = vmatpush1.msra.mxu0 0.0
    %203 = vmatprep.subr.mxu0 0.0
    %204 = vmatpush1.msra.mxu0 0.0
    %205 = vmatprep.subr.mxu0 0.0
    %206 = vmatpush1.msra.mxu0 0.0
    %207 = vmatprep.mubr.f32.mxu0 0.0
    %208 = vmatmul.mubr.f32.gmra.mrb[0].mxu0 %v141
    %v209 = vpop.f32.mrb[0].mxu0
    %v210 = vadd.f32 0.0, %v209
    %v211 = vpop.f32.mrb[0].mxu0
    %212 = vdwg.mxu0
    %v213 = vadd.f32 %v131, %v210
    %v214 = vtanh.pop %v213
    %v216 = vsel %vm139, %v214, 0
    %218 = vmatprep.subr.mxu0 0.0
    %219 = vmatpush1.msra.mxu0 %v42
    %220 = vmatprep.subr.mxu0 0.0
    %221 = vmatpush1.msra.mxu0 %v43
    %222 = vmatprep.subr.mxu0 0.0
    %223 = vmatpush1.msra.mxu0 %v44
    %224 = vmatprep.subr.mxu0 0.0
    %225 = vmatpush1.msra.mxu0 %v45
    %226 = vmatprep.subr.mxu0 0.0
    %227 = vmatpush1.msra.mxu0 0.0
    %228 = vmatprep.subr.mxu0 0.0
    %229 = vmatpush1.msra.mxu0 0.0
    %230 = vmatprep.subr.mxu0 0.0
    %231 = vmatpush1.msra.mxu0 0.0
    %232 = vmatprep.subr.mxu0 0.0
    %233 = vmatpush1.msra.mxu0 0.0
    %234 = vmatprep.subr.mxu0 0.0
    %235 = vmatpush1.msra.mxu0 0.0
    %236 = vmatprep.subr.mxu0 0.0
    %237 = vmatpush1.msra.mxu0 0.0
    %238 = vmatprep.subr.mxu0 0.0
    %239 = vmatpush1.msra.mxu0 0.0
    %240 = vmatprep.subr.mxu0 0.0
    %241 = vmatpush1.msra.mxu0 0.0
    %242 = vmatprep.subr.mxu0 0.0
    %243 = vmatpush1.msra.mxu0 0.0
    %244 = vmatprep.subr.mxu0 0.0
    %245 = vmatpush1.msra.mxu0 0.0
    %246 = vmatprep.subr.mxu0 0.0
    %247 = vmatpush1.msra.mxu0 0.0
    %248 = vmatprep.subr.mxu0 0.0
    %249 = vmatpush1.msra.mxu0 0.0
    %250 = vmatprep.subr.mxu0 0.0
    %251 = vmatpush1.msra.mxu0 0.0
    %252 = vmatprep.subr.mxu0 0.0
    %253 = vmatpush1.msra.mxu0 0.0
    %254 = vmatprep.subr.mxu0 0.0
    %255 = vmatpush1.msra.mxu0 0.0
    %256 = vmatprep.subr.mxu0 0.0
    %257 = vmatpush1.msra.mxu0 0.0
    %258 = vmatprep.subr.mxu0 0.0
    %259 = vmatpush1.msra.mxu0 0.0
    %260 = vmatprep.subr.mxu0 0.0
    %261 = vmatpush1.msra.mxu0 0.0
    %262 = vmatprep.subr.mxu0 0.0
    %263 = vmatpush1.msra.mxu0 0.0
    %264 = vmatprep.subr.mxu0 0.0
    %265 = vmatpush1.msra.mxu0 0.0
    %266 = vmatprep.subr.mxu0 0.0
    %267 = vmatpush1.msra.mxu0 0.0
    %268 = vmatprep.subr.mxu0 0.0
    %269 = vmatpush1.msra.mxu0 0.0
    %270 = vmatprep.subr.mxu0 0.0
    %271 = vmatpush1.msra.mxu0 0.0
    %272 = vmatprep.subr.mxu0 0.0
    %273 = vmatpush1.msra.mxu0 0.0
    %274 = vmatprep.subr.mxu0 0.0
    %275 = vmatpush1.msra.mxu0 0.0
    %276 = vmatprep.subr.mxu0 0.0
    %277 = vmatpush1.msra.mxu0 0.0
    %278 = vmatprep.subr.mxu0 0.0
    %279 = vmatpush1.msra.mxu0 0.0
    %280 = vmatprep.subr.mxu0 0.0
    %281 = vmatpush1.msra.mxu0 0.0
    %282 = vmatprep.mubr.f32.mxu0 0.0
    %283 = vmatmul.mubr.f32.gmra.mrb[0].mxu0 %v216
    %v284 = vpop.f32.mrb[0].mxu0
    %v285 = vadd.f32 0.0, %v284
    %v286 = vpop.f32.mrb[0].mxu0
    %287 = vdwg.mxu0
    %v289 = vrot.slane %v285, 6
    %v291 = vadd.f32 %v131, %v289
    %v292 = vtanh.pop %v291
    %v294 = vrot.slane %v292, 2
    %v295 = vsel %vm139, %v294, 0
    %297 = vmatprep.subr.mxu0 0.0
    %298 = vmatpush1.msra.mxu0 %v42
    %299 = vmatprep.subr.mxu0 0.0
    %300 = vmatpush1.msra.mxu0 %v43
    %301 = vmatprep.subr.mxu0 0.0
    %302 = vmatpush1.msra.mxu0 %v44
    %303 = vmatprep.subr.mxu0 0.0
    %304 = vmatpush1.msra.mxu0 %v45
    %305 = vmatprep.subr.mxu0 0.0
    %306 = vmatpush1.msra.mxu0 0.0
    %307 = vmatprep.subr.mxu0 0.0
    %308 = vmatpush1.msra.mxu0 0.0
    %309 = vmatprep.subr.mxu0 0.0
    %310 = vmatpush1.msra.mxu0 0.0
    %311 = vmatprep.subr.mxu0 0.0
    %312 = vmatpush1.msra.mxu0 0.0
    %313 = vmatprep.subr.mxu0 0.0
    %314 = vmatpush1.msra.mxu0 0.0
    %315 = vmatprep.subr.mxu0 0.0
    %316 = vmatpush1.msra.mxu0 0.0
    %317 = vmatprep.subr.mxu0 0.0
    %318 = vmatpush1.msra.mxu0 0.0
    %319 = vmatprep.subr.mxu0 0.0
    %320 = vmatpush1.msra.mxu0 0.0
    %321 = vmatprep.subr.mxu0 0.0
    %322 = vmatpush1.msra.mxu0 0.0
    %323 = vmatprep.subr.mxu0 0.0
    %324 = vmatpush1.msra.mxu0 0.0
    %325 = vmatprep.subr.mxu0 0.0
    %326 = vmatpush1.msra.mxu0 0.0
    %327 = vmatprep.subr.mxu0 0.0
    %328 = vmatpush1.msra.mxu0 0.0
    %329 = vmatprep.subr.mxu0 0.0
    %330 = vmatpush1.msra.mxu0 0.0
    %331 = vmatprep.subr.mxu0 0.0
    %332 = vmatpush1.msra.mxu0 0.0
    %333 = vmatprep.subr.mxu0 0.0
    %334 = vmatpush1.msra.mxu0 0.0
    %335 = vmatprep.subr.mxu0 0.0
    %336 = vmatpush1.msra.mxu0 0.0
    %337 = vmatprep.subr.mxu0 0.0
    %338 = vmatpush1.msra.mxu0 0.0
    %339 = vmatprep.subr.mxu0 0.0
    %340 = vmatpush1.msra.mxu0 0.0
    %341 = vmatprep.subr.mxu0 0.0
    %342 = vmatpush1.msra.mxu0 0.0
    %343 = vmatprep.subr.mxu0 0.0
    %344 = vmatpush1.msra.mxu0 0.0
    %345 = vmatprep.subr.mxu0 0.0
    %346 = vmatpush1.msra.mxu0 0.0
    %347 = vmatprep.subr.mxu0 0.0
    %348 = vmatpush1.msra.mxu0 0.0
    %349 = vmatprep.subr.mxu0 0.0
    %350 = vmatpush1.msra.mxu0 0.0
    %351 = vmatprep.subr.mxu0 0.0
    %352 = vmatpush1.msra.mxu0 0.0
    %353 = vmatprep.subr.mxu0 0.0
    %354 = vmatpush1.msra.mxu0 0.0
    %355 = vmatprep.subr.mxu0 0.0
    %356 = vmatpush1.msra.mxu0 0.0
    %357 = vmatprep.subr.mxu0 0.0
    %358 = vmatpush1.msra.mxu0 0.0
    %359 = vmatprep.subr.mxu0 0.0
    %360 = vmatpush1.msra.mxu0 0.0
    %361 = vmatprep.mubr.f32.mxu0 0.0
    %362 = vmatmul.mubr.f32.gmra.mrb[0].mxu0 %v295
    %v363 = vpop.f32.mrb[0].mxu0
    %v364 = vadd.f32 0.0, %v363
    %v365 = vpop.f32.mrb[0].mxu0
    %366 = vdwg.mxu0
    %v368 = vrot.slane %v364, 4
    %v370 = vadd.f32 %v131, %v368
    %v371 = vtanh.pop %v370
    %v373 = vrot.slane %v371, 4
    %v374 = vsel %vm139, %v373, 0
    %376 = vmatprep.subr.mxu0 0.0
    %377 = vmatpush1.msra.mxu0 %v42
    %378 = vmatprep.subr.mxu0 0.0
    %379 = vmatpush1.msra.mxu0 %v43
    %380 = vmatprep.subr.mxu0 0.0
    %381 = vmatpush1.msra.mxu0 %v44
    %382 = vmatprep.subr.mxu0 0.0
    %383 = vmatpush1.msra.mxu0 %v45
    %384 = vmatprep.subr.mxu0 0.0
    %385 = vmatpush1.msra.mxu0 0.0
    %386 = vmatprep.subr.mxu0 0.0
    %387 = vmatpush1.msra.mxu0 0.0
    %388 = vmatprep.subr.mxu0 0.0
    %389 = vmatpush1.msra.mxu0 0.0
    %390 = vmatprep.subr.mxu0 0.0
    %391 = vmatpush1.msra.mxu0 0.0
    %392 = vmatprep.subr.mxu0 0.0
    %393 = vmatpush1.msra.mxu0 0.0
    %394 = vmatprep.subr.mxu0 0.0
    %395 = vmatpush1.msra.mxu0 0.0
    %396 = vmatprep.subr.mxu0 0.0
    %397 = vmatpush1.msra.mxu0 0.0
    %398 = vmatprep.subr.mxu0 0.0
    %399 = vmatpush1.msra.mxu0 0.0
    %400 = vmatprep.subr.mxu0 0.0
    %401 = vmatpush1.msra.mxu0 0.0
    %402 = vmatprep.subr.mxu0 0.0
    %403 = vmatpush1.msra.mxu0 0.0
    %404 = vmatprep.subr.mxu0 0.0
    %405 = vmatpush1.msra.mxu0 0.0
    %406 = vmatprep.subr.mxu0 0.0
    %407 = vmatpush1.msra.mxu0 0.0
    %408 = vmatprep.subr.mxu0 0.0
    %409 = vmatpush1.msra.mxu0 0.0
    %410 = vmatprep.subr.mxu0 0.0
    %411 = vmatpush1.msra.mxu0 0.0
    %412 = vmatprep.subr.mxu0 0.0
    %413 = vmatpush1.msra.mxu0 0.0
    %414 = vmatprep.subr.mxu0 0.0
    %415 = vmatpush1.msra.mxu0 0.0
    %416 = vmatprep.subr.mxu0 0.0
    %417 = vmatpush1.msra.mxu0 0.0
    %418 = vmatprep.subr.mxu0 0.0
    %419 = vmatpush1.msra.mxu0 0.0
    %420 = vmatprep.subr.mxu0 0.0
    %421 = vmatpush1.msra.mxu0 0.0
    %422 = vmatprep.subr.mxu0 0.0
    %423 = vmatpush1.msra.mxu0 0.0
    %424 = vmatprep.subr.mxu0 0.0
    %425 = vmatpush1.msra.mxu0 0.0
    %426 = vmatprep.subr.mxu0 0.0
    %427 = vmatpush1.msra.mxu0 0.0
    %428 = vmatprep.subr.mxu0 0.0
    %429 = vmatpush1.msra.mxu0 0.0
    %430 = vmatprep.subr.mxu0 0.0
    %431 = vmatpush1.msra.mxu0 0.0
    %432 = vmatprep.subr.mxu0 0.0
    %433 = vmatpush1.msra.mxu0 0.0
    %434 = vmatprep.subr.mxu0 0.0
    %435 = vmatpush1.msra.mxu0 0.0
    %436 = vmatprep.subr.mxu0 0.0
    %437 = vmatpush1.msra.mxu0 0.0
    %438 = vmatprep.subr.mxu0 0.0
    %439 = vmatpush1.msra.mxu0 0.0
    %440 = vmatprep.mubr.f32.mxu0 0.0
    %441 = vmatmul.mubr.f32.gmra.mrb[0].mxu0 %v374
    %v442 = vpop.f32.mrb[0].mxu0
    %v443 = vadd.f32 0.0, %v442
    %v444 = vpop.f32.mrb[0].mxu0
    %445 = vdwg.mxu0
    %v447 = vrot.slane %v443, 2
    %v449 = vadd.f32 %v131, %v447
    %v450 = vtanh.pop %v449
    %v452 = vrot.slane %v450, 6
    %v453 = vsel %vm139, %v452, 0
    %455 = vmatprep.subr.mxu0 0.0
    %456 = vmatpush1.msra.mxu0 %v42
    %457 = vmatprep.subr.mxu0 0.0
    %458 = vmatpush1.msra.mxu0 %v43
    %459 = vmatprep.subr.mxu0 0.0
    %460 = vmatpush1.msra.mxu0 %v44
    %461 = vmatprep.subr.mxu0 0.0
    %462 = vmatpush1.msra.mxu0 %v45
    %463 = vmatprep.subr.mxu0 0.0
    %464 = vmatpush1.msra.mxu0 0.0
    %465 = vmatprep.subr.mxu0 0.0
    %466 = vmatpush1.msra.mxu0 0.0
    %467 = vmatprep.subr.mxu0 0.0
    %468 = vmatpush1.msra.mxu0 0.0
    %469 = vmatprep.subr.mxu0 0.0
    %470 = vmatpush1.msra.mxu0 0.0
    %471 = vmatprep.subr.mxu0 0.0
    %472 = vmatpush1.msra.mxu0 0.0
    %473 = vmatprep.subr.mxu0 0.0
    %474 = vmatpush1.msra.mxu0 0.0
    %475 = vmatprep.subr.mxu0 0.0
    %476 = vmatpush1.msra.mxu0 0.0
    %477 = vmatprep.subr.mxu0 0.0
    %478 = vmatpush1.msra.mxu0 0.0
    %479 = vmatprep.subr.mxu0 0.0
    %480 = vmatpush1.msra.mxu0 0.0
    %481 = vmatprep.subr.mxu0 0.0
    %482 = vmatpush1.msra.mxu0 0.0
    %483 = vmatprep.subr.mxu0 0.0
    %484 = vmatpush1.msra.mxu0 0.0
    %485 = vmatprep.subr.mxu0 0.0
    %486 = vmatpush1.msra.mxu0 0.0
    %487 = vmatprep.subr.mxu0 0.0
    %488 = vmatpush1.msra.mxu0 0.0
    %489 = vmatprep.subr.mxu0 0.0
    %490 = vmatpush1.msra.mxu0 0.0
    %491 = vmatprep.subr.mxu0 0.0
    %492 = vmatpush1.msra.mxu0 0.0
    %493 = vmatprep.subr.mxu0 0.0
    %494 = vmatpush1.msra.mxu0 0.0
    %495 = vmatprep.subr.mxu0 0.0
    %496 = vmatpush1.msra.mxu0 0.0
    %497 = vmatprep.subr.mxu0 0.0
    %498 = vmatpush1.msra.mxu0 0.0
    %499 = vmatprep.subr.mxu0 0.0
    %500 = vmatpush1.msra.mxu0 0.0
    %501 = vmatprep.subr.mxu0 0.0
    %502 = vmatpush1.msra.mxu0 0.0
    %503 = vmatprep.subr.mxu0 0.0
    %504 = vmatpush1.msra.mxu0 0.0
    %505 = vmatprep.subr.mxu0 0.0
    %506 = vmatpush1.msra.mxu0 0.0
    %507 = vmatprep.subr.mxu0 0.0
    %508 = vmatpush1.msra.mxu0 0.0
    %509 = vmatprep.subr.mxu0 0.0
    %510 = vmatpush1.msra.mxu0 0.0
    %511 = vmatprep.subr.mxu0 0.0
    %512 = vmatpush1.msra.mxu0 0.0
    %513 = vmatprep.subr.mxu0 0.0
    %514 = vmatpush1.msra.mxu0 0.0
    %515 = vmatprep.subr.mxu0 0.0
    %516 = vmatpush1.msra.mxu0 0.0
    %517 = vmatprep.subr.mxu0 0.0
    %518 = vmatpush1.msra.mxu0 0.0
    %519 = vmatprep.mubr.f32.mxu0 0.0
    %520 = vmatmul.mubr.f32.gmra.mrb[0].mxu0 %v453
    %v521 = vpop.f32.mrb[0].mxu0
    %v522 = vadd.f32 0.0, %v521
    %v523 = vpop.f32.mrb[0].mxu0
    %524 = vdwg.mxu0
    %v525 = vadd.f32 %v136, %v522
    %v526 = vtanh.pop %v525
    %v528 = vsel %vm139, %v526, 0
    %530 = vmatprep.subr.mxu0 0.0
    %531 = vmatpush1.msra.mxu0 %v42
    %532 = vmatprep.subr.mxu0 0.0
    %533 = vmatpush1.msra.mxu0 %v43
    %534 = vmatprep.subr.mxu0 0.0
    %535 = vmatpush1.msra.mxu0 %v44
    %536 = vmatprep.subr.mxu0 0.0
    %537 = vmatpush1.msra.mxu0 %v45
    %538 = vmatprep.subr.mxu0 0.0
    %539 = vmatpush1.msra.mxu0 0.0
    %540 = vmatprep.subr.mxu0 0.0
    %541 = vmatpush1.msra.mxu0 0.0
    %542 = vmatprep.subr.mxu0 0.0
    %543 = vmatpush1.msra.mxu0 0.0
    %544 = vmatprep.subr.mxu0 0.0
    %545 = vmatpush1.msra.mxu0 0.0
    %546 = vmatprep.subr.mxu0 0.0
    %547 = vmatpush1.msra.mxu0 0.0
    %548 = vmatprep.subr.mxu0 0.0
    %549 = vmatpush1.msra.mxu0 0.0
    %550 = vmatprep.subr.mxu0 0.0
    %551 = vmatpush1.msra.mxu0 0.0
    %552 = vmatprep.subr.mxu0 0.0
    %553 = vmatpush1.msra.mxu0 0.0
    %554 = vmatprep.subr.mxu0 0.0
    %555 = vmatpush1.msra.mxu0 0.0
    %556 = vmatprep.subr.mxu0 0.0
    %557 = vmatpush1.msra.mxu0 0.0
    %558 = vmatprep.subr.mxu0 0.0
    %559 = vmatpush1.msra.mxu0 0.0
    %560 = vmatprep.subr.mxu0 0.0
    %561 = vmatpush1.msra.mxu0 0.0
    %562 = vmatprep.subr.mxu0 0.0
    %563 = vmatpush1.msra.mxu0 0.0
    %564 = vmatprep.subr.mxu0 0.0
    %565 = vmatpush1.msra.mxu0 0.0
    %566 = vmatprep.subr.mxu0 0.0
    %567 = vmatpush1.msra.mxu0 0.0
    %568 = vmatprep.subr.mxu0 0.0
    %569 = vmatpush1.msra.mxu0 0.0
    %570 = vmatprep.subr.mxu0 0.0
    %571 = vmatpush1.msra.mxu0 0.0
    %572 = vmatprep.subr.mxu0 0.0
    %573 = vmatpush1.msra.mxu0 0.0
    %574 = vmatprep.subr.mxu0 0.0
    %575 = vmatpush1.msra.mxu0 0.0
    %576 = vmatprep.subr.mxu0 0.0
    %577 = vmatpush1.msra.mxu0 0.0
    %578 = vmatprep.subr.mxu0 0.0
    %579 = vmatpush1.msra.mxu0 0.0
    %580 = vmatprep.subr.mxu0 0.0
    %581 = vmatpush1.msra.mxu0 0.0
    %582 = vmatprep.subr.mxu0 0.0
    %583 = vmatpush1.msra.mxu0 0.0
    %584 = vmatprep.subr.mxu0 0.0
    %585 = vmatpush1.msra.mxu0 0.0
    %586 = vmatprep.subr.mxu0 0.0
    %587 = vmatpush1.msra.mxu0 0.0
    %588 = vmatprep.subr.mxu0 0.0
    %589 = vmatpush1.msra.mxu0 0.0
    %590 = vmatprep.subr.mxu0 0.0
    %591 = vmatpush1.msra.mxu0 0.0
    %592 = vmatprep.subr.mxu0 0.0
    %593 = vmatpush1.msra.mxu0 0.0
    %594 = vmatprep.mubr.f32.mxu0 0.0
    %595 = vmatmul.mubr.f32.gmra.mrb[0].mxu0 %v528
    %v596 = vpop.f32.mrb[0].mxu0
    %v597 = vadd.f32 0.0, %v596
    %v598 = vpop.f32.mrb[0].mxu0
    %599 = vdwg.mxu0
    %v601 = vrot.slane %v597, 6
    %v603 = vadd.f32 %v136, %v601
    %v604 = vtanh.pop %v603
    %v606 = vrot.slane %v604, 2
    %v607 = vsel %vm139, %v606, 0
    %609 = vmatprep.subr.mxu0 0.0
    %610 = vmatpush1.msra.mxu0 %v42
    %611 = vmatprep.subr.mxu0 0.0
    %612 = vmatpush1.msra.mxu0 %v43
    %613 = vmatprep.subr.mxu0 0.0
    %614 = vmatpush1.msra.mxu0 %v44
    %615 = vmatprep.subr.mxu0 0.0
    %616 = vmatpush1.msra.mxu0 %v45
    %617 = vmatprep.subr.mxu0 0.0
    %618 = vmatpush1.msra.mxu0 0.0
    %619 = vmatprep.subr.mxu0 0.0
    %620 = vmatpush1.msra.mxu0 0.0
    %621 = vmatprep.subr.mxu0 0.0
    %622 = vmatpush1.msra.mxu0 0.0
    %623 = vmatprep.subr.mxu0 0.0
    %624 = vmatpush1.msra.mxu0 0.0
    %625 = vmatprep.subr.mxu0 0.0
    %626 = vmatpush1.msra.mxu0 0.0
    %627 = vmatprep.subr.mxu0 0.0
    %628 = vmatpush1.msra.mxu0 0.0
    %629 = vmatprep.subr.mxu0 0.0
    %630 = vmatpush1.msra.mxu0 0.0
    %631 = vmatprep.subr.mxu0 0.0
    %632 = vmatpush1.msra.mxu0 0.0
    %633 = vmatprep.subr.mxu0 0.0
    %634 = vmatpush1.msra.mxu0 0.0
    %635 = vmatprep.subr.mxu0 0.0
    %636 = vmatpush1.msra.mxu0 0.0
    %637 = vmatprep.subr.mxu0 0.0
    %638 = vmatpush1.msra.mxu0 0.0
    %639 = vmatprep.subr.mxu0 0.0
    %640 = vmatpush1.msra.mxu0 0.0
    %641 = vmatprep.subr.mxu0 0.0
    %642 = vmatpush1.msra.mxu0 0.0
    %643 = vmatprep.subr.mxu0 0.0
    %644 = vmatpush1.msra.mxu0 0.0
    %645 = vmatprep.subr.mxu0 0.0
    %646 = vmatpush1.msra.mxu0 0.0
    %647 = vmatprep.subr.mxu0 0.0
    %648 = vmatpush1.msra.mxu0 0.0
    %649 = vmatprep.subr.mxu0 0.0
    %650 = vmatpush1.msra.mxu0 0.0
    %651 = vmatprep.subr.mxu0 0.0
    %652 = vmatpush1.msra.mxu0 0.0
    %653 = vmatprep.subr.mxu0 0.0
    %654 = vmatpush1.msra.mxu0 0.0
    %655 = vmatprep.subr.mxu0 0.0
    %656 = vmatpush1.msra.mxu0 0.0
    %657 = vmatprep.subr.mxu0 0.0
    %658 = vmatpush1.msra.mxu0 0.0
    %659 = vmatprep.subr.mxu0 0.0
    %660 = vmatpush1.msra.mxu0 0.0
    %661 = vmatprep.subr.mxu0 0.0
    %662 = vmatpush1.msra.mxu0 0.0
    %663 = vmatprep.subr.mxu0 0.0
    %664 = vmatpush1.msra.mxu0 0.0
    %665 = vmatprep.subr.mxu0 0.0
    %666 = vmatpush1.msra.mxu0 0.0
    %667 = vmatprep.subr.mxu0 0.0
    %668 = vmatpush1.msra.mxu0 0.0
    %669 = vmatprep.subr.mxu0 0.0
    %670 = vmatpush1.msra.mxu0 0.0
    %671 = vmatprep.subr.mxu0 0.0
    %672 = vmatpush1.msra.mxu0 0.0
    %673 = vmatprep.mubr.f32.mxu0 0.0
    %674 = vmatmul.mubr.f32.gmra.mrb[0].mxu0 %v607
    %v675 = vpop.f32.mrb[0].mxu0
    %v676 = vadd.f32 0.0, %v675
    %v677 = vpop.f32.mrb[0].mxu0
    %678 = vdwg.mxu0
    %v680 = vrot.slane %v676, 4
    %v682 = vadd.f32 %v136, %v680
    %v683 = vtanh.pop %v682
    %v685 = vrot.slane %v683, 4
    %v686 = vsel %vm139, %v685, 0
    %688 = vmatprep.subr.mxu0 0.0
    %689 = vmatpush1.msra.mxu0 %v42
    %690 = vmatprep.subr.mxu0 0.0
    %691 = vmatpush1.msra.mxu0 %v43
    %692 = vmatprep.subr.mxu0 0.0
    %693 = vmatpush1.msra.mxu0 %v44
    %694 = vmatprep.subr.mxu0 0.0
    %695 = vmatpush1.msra.mxu0 %v45
    %696 = vmatprep.subr.mxu0 0.0
    %697 = vmatpush1.msra.mxu0 0.0
    %698 = vmatprep.subr.mxu0 0.0
    %699 = vmatpush1.msra.mxu0 0.0
    %700 = vmatprep.subr.mxu0 0.0
    %701 = vmatpush1.msra.mxu0 0.0
    %702 = vmatprep.subr.mxu0 0.0
    %703 = vmatpush1.msra.mxu0 0.0
    %704 = vmatprep.subr.mxu0 0.0
    %705 = vmatpush1.msra.mxu0 0.0
    %706 = vmatprep.subr.mxu0 0.0
    %707 = vmatpush1.msra.mxu0 0.0
    %708 = vmatprep.subr.mxu0 0.0
    %709 = vmatpush1.msra.mxu0 0.0
    %710 = vmatprep.subr.mxu0 0.0
    %711 = vmatpush1.msra.mxu0 0.0
    %712 = vmatprep.subr.mxu0 0.0
    %713 = vmatpush1.msra.mxu0 0.0
    %714 = vmatprep.subr.mxu0 0.0
    %715 = vmatpush1.msra.mxu0 0.0
    %716 = vmatprep.subr.mxu0 0.0
    %717 = vmatpush1.msra.mxu0 0.0
    %718 = vmatprep.subr.mxu0 0.0
    %719 = vmatpush1.msra.mxu0 0.0
    %720 = vmatprep.subr.mxu0 0.0
    %721 = vmatpush1.msra.mxu0 0.0
    %722 = vmatprep.subr.mxu0 0.0
    %723 = vmatpush1.msra.mxu0 0.0
    %724 = vmatprep.subr.mxu0 0.0
    %725 = vmatpush1.msra.mxu0 0.0
    %726 = vmatprep.subr.mxu0 0.0
    %727 = vmatpush1.msra.mxu0 0.0
    %728 = vmatprep.subr.mxu0 0.0
    %729 = vmatpush1.msra.mxu0 0.0
    %730 = vmatprep.subr.mxu0 0.0
    %731 = vmatpush1.msra.mxu0 0.0
    %732 = vmatprep.subr.mxu0 0.0
    %733 = vmatpush1.msra.mxu0 0.0
    %734 = vmatprep.subr.mxu0 0.0
    %735 = vmatpush1.msra.mxu0 0.0
    %736 = vmatprep.subr.mxu0 0.0
    %737 = vmatpush1.msra.mxu0 0.0
    %738 = vmatprep.subr.mxu0 0.0
    %739 = vmatpush1.msra.mxu0 0.0
    %740 = vmatprep.subr.mxu0 0.0
    %741 = vmatpush1.msra.mxu0 0.0
    %742 = vmatprep.subr.mxu0 0.0
    %743 = vmatpush1.msra.mxu0 0.0
    %744 = vmatprep.subr.mxu0 0.0
    %745 = vmatpush1.msra.mxu0 0.0
    %746 = vmatprep.subr.mxu0 0.0
    %747 = vmatpush1.msra.mxu0 0.0
    %748 = vmatprep.subr.mxu0 0.0
    %749 = vmatpush1.msra.mxu0 0.0
    %750 = vmatprep.subr.mxu0 0.0
    %751 = vmatpush1.msra.mxu0 0.0
    %752 = vmatprep.mubr.f32.mxu0 0.0
    %753 = vmatmul.mubr.f32.gmra.mrb[0].mxu0 %v686
    %v754 = vpop.f32.mrb[0].mxu0
    %v755 = vadd.f32 0.0, %v754
    %v756 = vpop.f32.mrb[0].mxu0
    %757 = vdwg.mxu0
    %v759 = vrot.slane %v755, 2
    %v761 = vadd.f32 %v136, %v759
    %v762 = vtanh.pop %v761
    %v763 = vld [vmem:[#allocation2] sm:$0xff]
    %v764 = vld [vmem:[#allocation2 + $0x8] sm:$0xff]
    %v765 = vld [vmem:[#allocation2 + $0x10] sm:$0xff]
    %v766 = vld [vmem:[#allocation2 + $0x18] sm:$0xff]
    %v767 = vld [vmem:[%s6] sm:$0x1]
    %v769 = vlaneseq
    %v770 = vshrl.u32 %v769, 7
    %v771 = vsub.s32 0, %v770
    %v772 = vrot.slane %v767, %v771
    %v775 = vrot.slane %v762, 6
    %v776 = vsel %vm139, %v775, 0
    %778 = vmatprep.subr.mxu0 0.0
    %779 = vmatpush1.msra.mxu0 %v763
    %780 = vmatprep.subr.mxu0 0.0
    %781 = vmatpush1.msra.mxu0 %v764
    %782 = vmatprep.subr.mxu0 0.0
    %783 = vmatpush1.msra.mxu0 %v765
    %784 = vmatprep.subr.mxu0 0.0
    %785 = vmatpush1.msra.mxu0 %v766
    %786 = vmatprep.subr.mxu0 0.0
    %787 = vmatpush1.msra.mxu0 0.0
    %788 = vmatprep.subr.mxu0 0.0
    %789 = vmatpush1.msra.mxu0 0.0
    %790 = vmatprep.subr.mxu0 0.0
    %791 = vmatpush1.msra.mxu0 0.0
    %792 = vmatprep.subr.mxu0 0.0
    %793 = vmatpush1.msra.mxu0 0.0
    %794 = vmatprep.subr.mxu0 0.0
    %795 = vmatpush1.msra.mxu0 0.0
    %796 = vmatprep.subr.mxu0 0.0
    %797 = vmatpush1.msra.mxu0 0.0
    %798 = vmatprep.subr.mxu0 0.0
    %799 = vmatpush1.msra.mxu0 0.0
    %800 = vmatprep.subr.mxu0 0.0
    %801 = vmatpush1.msra.mxu0 0.0
    %802 = vmatprep.subr.mxu0 0.0
    %803 = vmatpush1.msra.mxu0 0.0
    %804 = vmatprep.subr.mxu0 0.0
    %805 = vmatpush1.msra.mxu0 0.0
    %806 = vmatprep.subr.mxu0 0.0
    %807 = vmatpush1.msra.mxu0 0.0
    %808 = vmatprep.subr.mxu0 0.0
    %809 = vmatpush1.msra.mxu0 0.0
    %810 = vmatprep.subr.mxu0 0.0
    %811 = vmatpush1.msra.mxu0 0.0
    %812 = vmatprep.subr.mxu0 0.0
    %813 = vmatpush1.msra.mxu0 0.0
    %814 = vmatprep.subr.mxu0 0.0
    %815 = vmatpush1.msra.mxu0 0.0
    %816 = vmatprep.subr.mxu0 0.0
    %817 = vmatpush1.msra.mxu0 0.0
    %818 = vmatprep.subr.mxu0 0.0
    %819 = vmatpush1.msra.mxu0 0.0
    %820 = vmatprep.subr.mxu0 0.0
    %821 = vmatpush1.msra.mxu0 0.0
    %822 = vmatprep.subr.mxu0 0.0
    %823 = vmatpush1.msra.mxu0 0.0
    %824 = vmatprep.subr.mxu0 0.0
    %825 = vmatpush1.msra.mxu0 0.0
    %826 = vmatprep.subr.mxu0 0.0
    %827 = vmatpush1.msra.mxu0 0.0
    %828 = vmatprep.subr.mxu0 0.0
    %829 = vmatpush1.msra.mxu0 0.0
    %830 = vmatprep.subr.mxu0 0.0
    %831 = vmatpush1.msra.mxu0 0.0
    %832 = vmatprep.subr.mxu0 0.0
    %833 = vmatpush1.msra.mxu0 0.0
    %834 = vmatprep.subr.mxu0 0.0
    %835 = vmatpush1.msra.mxu0 0.0
    %836 = vmatprep.subr.mxu0 0.0
    %837 = vmatpush1.msra.mxu0 0.0
    %838 = vmatprep.subr.mxu0 0.0
    %839 = vmatpush1.msra.mxu0 0.0
    %840 = vmatprep.subr.mxu0 0.0
    %841 = vmatpush1.msra.mxu0 0.0
    %842 = vmatprep.mubr.f32.mxu0 0.0
    %843 = vmatmul.mubr.f32.gmra.mrb[0].mxu0 %v776
    %v844 = vpop.f32.mrb[0].mxu0
    %v845 = vadd.f32 %v772, %v844
    %v846 = vpop.f32.mrb[0].mxu0
    %847 = vdwg.mxu0
    %848 = vst [vmem:[#allocation5] sm:$0x3] %v845
    // Predicated region
    $region34: #{forward.1} parent=1 // pred_check
      _
    $region35: #{forward.1} parent=1 // pred_check_branch
      %850 = sbr.rel (0) target = $region37
    $region36: #{forward.1} parent=1 // pred_region
      %s852 = ssub.s32 32, 32
      %853 = vsyncadd [#allocation4], %s852
      %s855 = sshll.u32 [#allocation5], 4
      %s856 = int_to_ptr.vmem [resolvable:$true] %s855
      %858 = dma.vmem_to_hbm [thread:$0]  %s856, 32, %s7, [#allocation4]
    $region37: #{forward.1} parent=1 // pred_fallthru
      _
    // Predicated region
    $region38: #{forward.1} parent=1 // pred_check
      _
    $region39: #{forward.1} parent=1 // pred_check_branch
      %860 = sbr.rel (0) target = $region41
    $region40: #{forward.1} parent=1 // pred_region
      %861 = dma.done [#allocation4], 32
    $region41: #{forward.1} parent=1 // pred_fallthru
      _
    %862 = vsyncpa [#allocation3], 1
    %863 = vsyncpa [#allocation4], 1

</llo_original>
